<compile_context>
chip_gen: v5e
topology: v5e:2x2
jax: 0.10.0
libtpu: 0.0.40
codegen_flags: <defaults>
</compile_context>

<pallas_src>
import functools

import jax
import jax.numpy as jnp
from jax.experimental import pallas as pl
from jax.experimental.pallas import tpu as pltpu


# ---------------------------------------------------------------------------
# Kernel 1: fused QKV projection   qkv = x @ [Wq|Wk|Wv]^T + [bq|bk|bv]
# ---------------------------------------------------------------------------

def _qkv_proj_kernel(x_ref, w_ref, b_ref, q_ref, k_ref, v_ref, *, hidden):
    # One wide bf16 MXU GEMM (K = D, N = 3D) — the dominant, well-filled matmul.
    x = x_ref[...]                                              # (tr, D)  bf16
    qkv = jnp.dot(x, w_ref[...],
                  preferred_element_type=jnp.float32)           # (tr, 3D) f32
    qkv = qkv + b_ref[...]                                      # f32 bias add

    D = hidden
    # q already carries the 1/sqrt(E) scaling (folded into Wq/bq in the
    # wrapper).  q/k/v stored in bf16: they feed bf16 MXU contractions next.
    q_ref[...] = qkv[:, 0:D].astype(q_ref.dtype)
    k_ref[...] = qkv[:, D:2 * D].astype(k_ref.dtype)
    v_ref[...] = qkv[:, 2 * D:3 * D].astype(v_ref.dtype)


# ---------------------------------------------------------------------------
# Kernel 2: flash-style multi-head attention over (H, tile, E) blocks
# ---------------------------------------------------------------------------

def _flash_attn_kernel(q_ref, k_ref, v_ref, o_ref, m_sc, l_sc, acc_sc):
    kv = pl.program_id(2)

    @pl.when(kv == 0)
    def _():
        m_sc[...] = jnp.full_like(m_sc, -jnp.inf)
        l_sc[...] = jnp.zeros_like(l_sc)
        acc_sc[...] = jnp.zeros_like(acc_sc)

    q = q_ref[...]                                              # (H, tq, E) bf16
    k = k_ref[...]                                              # (H, tk, E) bf16
    v = v_ref[...]                                              # (H, tk, E) bf16

    # Head-batched score matmul on the MXU, f32 accumulation.
    # TODO(synk): with E (64 at BERT size) < MXU contraction width (128/256)
    # these matmuls underfill the systolic array; packing 2-4 heads along the
    # contraction would recover throughput. The fused QKV GEMM stays dominant.
    s = jnp.einsum('hqe,hke->hqk', q, k,
                   preferred_element_type=jnp.float32)          # (H, tq, tk) f32
    # TODO(synk): optional attention_mask add and training-time dropout on the
    # attention probabilities are not implemented (eval-mode forward only).

    # Online softmax update — all f32 on the VPU/EUP (bf16 only at MXU edges).
    m_prev = m_sc[...]
    m_new = jnp.maximum(m_prev, jnp.max(s, axis=-1, keepdims=True))
    alpha = jnp.exp(m_prev - m_new)
    p = jnp.exp(s - m_new)

    l_sc[...] = alpha * l_sc[...] + jnp.sum(p, axis=-1, keepdims=True)
    acc_sc[...] = alpha * acc_sc[...] + jnp.einsum(
        'hqk,hke->hqe', p.astype(jnp.bfloat16), v,
        preferred_element_type=jnp.float32)                     # (H, tq, E) f32
    m_sc[...] = m_new

    @pl.when(kv == pl.num_programs(2) - 1)
    def _():
        # Exact reciprocal so attention probabilities sum to 1.
        inv_l = pl.reciprocal(l_sc[...], approx=False)
        o_ref[...] = (acc_sc[...] * inv_l).astype(o_ref.dtype)


# ---------------------------------------------------------------------------
# Wrappers
# ---------------------------------------------------------------------------

def prepare_qkv_params(wq, bq, wk, bk, wv, bv, *, num_heads):
    """Fold 1/sqrt(E) into q, fuse the three nn.Linear projections, cast bf16.

    Call ONCE at init (this is an HBM-level transpose+concat of the weights);
    do not redo it on every forward call.  nn.Linear is y = x @ W^T + b, so
    each weight is transposed to (in, out) before fusing along the out dim.
    """
    D = wq.shape[0]
    assert D % num_heads == 0
    scaling = float(D // num_heads) ** -0.5
    w_qkv = jnp.concatenate(
        [wq.T * scaling, wk.T, wv.T], axis=1).astype(jnp.bfloat16)     # (D, 3D)
    b_qkv = jnp.concatenate(
        [bq * scaling, bk, bv]).reshape(1, 3 * D).astype(jnp.float32)  # (1, 3D)
    return w_qkv, b_qkv


@functools.partial(jax.jit, static_argnames=("num_heads",))
def self_attention(x, w_qkv, b_qkv, *, num_heads):
    """x: (N, L, D) -> (N, L, D). Forward of the PyTorch SelfAttention (eval)."""
    N, L, D = x.shape
    H = num_heads
    E = D // H

    # ---------------- QKV projection (Pallas kernel 1) ----------------
    rows = N * L
    tr = rows if rows <= 256 else 256          # row tile for the projection
    assert rows % tr == 0, "N*L must be divisible by the projection row tile"
    x2 = x.reshape(rows, D).astype(jnp.bfloat16)

    q, k, v = pl.pallas_call(
        functools.partial(_qkv_proj_kernel, hidden=D),
        out_shape=tuple(jax.ShapeDtypeStruct((rows, D), jnp.bfloat16)
                        for _ in range(3)),
        grid_spec=pltpu.PrefetchScalarGridSpec(
            num_scalar_prefetch=0,
            grid=(rows // tr,),
            in_specs=[
                pl.BlockSpec((tr, D), lambda i: (i, 0)),
                # Constant operands: block index never changes, so fetch once
                # and keep a SINGLE buffer (no wasted double-buffer VMEM).
                pl.BlockSpec((D, 3 * D), lambda i: (0, 0),
                             pipeline_mode=pl.Buffered(1)),
                pl.BlockSpec((1, 3 * D), lambda i: (0, 0),
                             pipeline_mode=pl.Buffered(1)),
            ],
            out_specs=[
                pl.BlockSpec((tr, D), lambda i: (i, 0)),
                pl.BlockSpec((tr, D), lambda i: (i, 0)),
                pl.BlockSpec((tr, D), lambda i: (i, 0)),
            ],
        ),
        compiler_params=pltpu.CompilerParams(
            dimension_semantics=("parallel",),
            vmem_limit_bytes=48 * 1024 * 1024),
    )(x2, w_qkv, b_qkv)

    # One XLA reshape+transpose per tensor to head-major layout; the attention
    # kernel then consumes batched (H, tile, E) blocks with no in-kernel
    # per-head lane slices / stacks.
    def to_heads(t):
        return t.reshape(N, L, H, E).transpose(0, 2, 1, 3)     # (N, H, L, E)

    qh, kh, vh = to_heads(q), to_heads(k), to_heads(v)

    # ---------------- Flash attention (Pallas kernel 2) ----------------
    # Tile sizes: biggest that fits VMEM.  128 is a safe default for v7x's
    # 64 MiB VMEM; v5e/v6e (128 MiB) can push tq toward 256-512 at BERT sizes.
    tq = L if L <= 128 else 128
    tk = L if L <= 128 else 128
    assert L % tq == 0 and L % tk == 0, "L must be divisible by the tiles"

    ctx = pl.pallas_call(
        _flash_attn_kernel,
        out_shape=jax.ShapeDtypeStruct((N, H, L, E), jnp.float32),
        grid_spec=pltpu.PrefetchScalarGridSpec(
            num_scalar_prefetch=0,
            grid=(N, L // tq, L // tk),
            in_specs=[
                pl.BlockSpec((None, H, tq, E), lambda n, qi, ki: (n, 0, qi, 0)),
                pl.BlockSpec((None, H, tk, E), lambda n, qi, ki: (n, 0, ki, 0)),
                pl.BlockSpec((None, H, tk, E), lambda n, qi, ki: (n, 0, ki, 0)),
            ],
            out_specs=pl.BlockSpec((None, H, tq, E),
                                   lambda n, qi, ki: (n, 0, qi, 0)),
            scratch_shapes=[
                pltpu.VMEM((H, tq, 1), jnp.float32),   # running row max
                pltpu.VMEM((H, tq, 1), jnp.float32),   # running denominator
                pltpu.VMEM((H, tq, E), jnp.float32),   # running context acc
            ],
        ),
        compiler_params=pltpu.CompilerParams(
            # batch + q-tile axes parallel (gives both v7x TensorCores work);
            # kv reduction axis last and arbitrary.
            dimension_semantics=("parallel", "parallel", "arbitrary"),
            vmem_limit_bytes=48 * 1024 * 1024),
    )(qh, kh, vh)

    # Merge heads back: 'n h l e -> n l (h e)' with one XLA transpose+reshape.
    return ctx.transpose(0, 2, 1, 3).reshape(N, L, D).astype(x.dtype)


def self_attention_ref(x, wq, bq, wk, bk, wv, bv, *, num_heads):
    """Pure-JAX f32 reference mirroring the PyTorch forward (eval mode)."""
    N, L, D = x.shape
    E = D // num_heads
    scaling = float(E) ** -0.5
    q = (x @ wq.T + bq).reshape(N, L, num_heads, E)
    k = (x @ wk.T + bk).reshape(N, L, num_heads, E)
    v = (x @ wv.T + bv).reshape(N, L, num_heads, E)
    scores = jnp.einsum('nlhe,nshe->nhls', q, k) * scaling
    probs = jax.nn.softmax(scores, axis=-1)
    ctx = jnp.einsum('nhls,nshe->nlhe', probs, v)
    return ctx.reshape(N, L, D)


if __name__ == "__main__":
    # Config: hidden_size=32, num_attention_heads=4 -> head_dim=8
    # (toy shapes; at realistic dims pad L/D to multiples of 128 for
    #  lane-dense stores and benchmark per TPU generation).
    N, L, D, H = 2, 8, 32, 4

    key = jax.random.PRNGKey(0)
    kx, kwq, kbq, kwk, kbk, kwv, kbv = jax.random.split(key, 7)

    x = jax.random.normal(kx, (N, L, D), dtype=jnp.float32)
    # nn.Linear weights are (out_features, in_features)
    wq = jax.random.normal(kwq, (D, D), dtype=jnp.float32) * 0.05
    bq = jax.random.normal(kbq, (D,), dtype=jnp.float32) * 0.05
    wk = jax.random.normal(kwk, (D, D), dtype=jnp.float32) * 0.05
    bk = jax.random.normal(kbk, (D,), dtype=jnp.float32) * 0.05
    wv = jax.random.normal(kwv, (D, D), dtype=jnp.float32) * 0.05
    bv = jax.random.normal(kbv, (D,), dtype=jnp.float32) * 0.05

    # Weight fusion / scaling fold done once, outside the per-call path.
    w_qkv, b_qkv = prepare_qkv_params(wq, bq, wk, bk, wv, bv, num_heads=H)

    out = self_attention(x, w_qkv, b_qkv, num_heads=H)
    out = jax.block_until_ready(out)

    ref = self_attention_ref(x, wq, bq, wk, bk, wv, bv, num_heads=H)
    assert out.shape == (N, L, D)
    # Tolerance reflects bf16 MXU inputs (softmax itself is exact f32).
    assert jnp.allclose(out, ref, atol=2e-2, rtol=2e-2), "mismatch vs reference"

    print("KERNEL_OK")
</pallas_src>

<mosaic_0001>
module attributes {stable_mosaic.version = 11 : i64} {
  func.func @_qkv_proj_kernel(%arg0: i32, %arg1: memref<16x32xbf16, #tpu.memory_space<vmem>>, %arg2: memref<32x96xbf16, #tpu.memory_space<vmem>>, %arg3: memref<1x96xf32, #tpu.memory_space<vmem>>, %arg4: memref<16x32xbf16, #tpu.memory_space<vmem>>, %arg5: memref<16x32xbf16, #tpu.memory_space<vmem>>, %arg6: memref<16x32xbf16, #tpu.memory_space<vmem>>) attributes {dimension_semantics = [#tpu.dimension_semantics<parallel>], iteration_bounds = array<i64: 1>, scalar_prefetch = 0 : i64, scratch_operands = 0 : i64, tpu.core_type = #tpu.core_type<tc>, window_params = [{transform_indices = @transform_0, window_bounds = array<i64: 16, 32>}, {pipeline_mode = #tpu.pipeline_mode<synchronous>, transform_indices = @transform_1, window_bounds = array<i64: 32, 96>}, {pipeline_mode = #tpu.pipeline_mode<synchronous>, transform_indices = @transform_2, window_bounds = array<i64: 1, 96>}, {transform_indices = @transform_3, window_bounds = array<i64: 16, 32>}, {transform_indices = @transform_4, window_bounds = array<i64: 16, 32>}, {transform_indices = @transform_5, window_bounds = array<i64: 16, 32>}]} {
    %c0 = arith.constant 0 : index
    %c0_0 = arith.constant 0 : index
    %0 = vector.load %arg1[%c0, %c0_0] : memref<16x32xbf16, #tpu.memory_space<vmem>>, vector<16x32xbf16>
    %c0_1 = arith.constant 0 : index
    %c0_2 = arith.constant 0 : index
    %1 = vector.load %arg2[%c0_1, %c0_2] : memref<32x96xbf16, #tpu.memory_space<vmem>>, vector<32x96xbf16>
    %cst = arith.constant dense<0.000000e+00> : vector<16x96xf32>
    %2 = tpu.matmul %0, %1, %cst {dimension_numbers = #tpu.dot_dimension_numbers<[1], [0], [0], [1], [0, 0, 1, 1], [], []>} : vector<16x32xbf16>, vector<32x96xbf16>, vector<16x96xf32> -> vector<16x96xf32>
    %c0_3 = arith.constant 0 : index
    %c0_4 = arith.constant 0 : index
    %3 = vector.load %arg3[%c0_3, %c0_4] : memref<1x96xf32, #tpu.memory_space<vmem>>, vector<1x96xf32>
    %4 = vector.broadcast %3 : vector<1x96xf32> to vector<16x96xf32>
    %5 = arith.addf %2, %4 : vector<16x96xf32>
    %6 = vector.extract_strided_slice %5 {offsets = [0, 0], sizes = [16, 32], strides = [1, 1]} : vector<16x96xf32> to vector<16x32xf32>
    %7 = arith.truncf %6 : vector<16x32xf32> to vector<16x32xbf16>
    %c0_5 = arith.constant 0 : index
    %c0_6 = arith.constant 0 : index
    %8 = vector.load %arg4[%c0_5, %c0_6] : memref<16x32xbf16, #tpu.memory_space<vmem>>, vector<16x32xbf16>
    tpu.vector_store %arg4[%c0_5, %c0_6], %7 {strides = array<i32>} : memref<16x32xbf16, #tpu.memory_space<vmem>>, vector<16x32xbf16>,
    %9 = vector.extract_strided_slice %5 {offsets = [0, 32], sizes = [16, 32], strides = [1, 1]} : vector<16x96xf32> to vector<16x32xf32>
    %10 = arith.truncf %9 : vector<16x32xf32> to vector<16x32xbf16>
    %c0_7 = arith.constant 0 : index
    %c0_8 = arith.constant 0 : index
    %11 = vector.load %arg5[%c0_7, %c0_8] : memref<16x32xbf16, #tpu.memory_space<vmem>>, vector<16x32xbf16>
    tpu.vector_store %arg5[%c0_7, %c0_8], %10 {strides = array<i32>} : memref<16x32xbf16, #tpu.memory_space<vmem>>, vector<16x32xbf16>,
    %12 = vector.extract_strided_slice %5 {offsets = [0, 64], sizes = [16, 32], strides = [1, 1]} : vector<16x96xf32> to vector<16x32xf32>
    %13 = arith.truncf %12 : vector<16x32xf32> to vector<16x32xbf16>
    %c0_9 = arith.constant 0 : index
    %c0_10 = arith.constant 0 : index
    %14 = vector.load %arg6[%c0_9, %c0_10] : memref<16x32xbf16, #tpu.memory_space<vmem>>, vector<16x32xbf16>
    tpu.vector_store %arg6[%c0_9, %c0_10], %13 {strides = array<i32>} : memref<16x32xbf16, #tpu.memory_space<vmem>>, vector<16x32xbf16>,
    return
  }
  func.func @transform_0(%arg0: i32) -> (i32, i32) {
    %c0_i32 = arith.constant 0 : i32
    %c0_i32_0 = arith.constant 0 : i32
    return %arg0, %c0_i32 : i32, i32
  }
  func.func @transform_1(%arg0: i32) -> (i32, i32) {
    %c0_i32 = arith.constant 0 : i32
    %c0_i32_0 = arith.constant 0 : i32
    %c0_i32_1 = arith.constant 0 : i32
    return %c0_i32, %c0_i32_0 : i32, i32
  }
  func.func @transform_2(%arg0: i32) -> (i32, i32) {
    %c0_i32 = arith.constant 0 : i32
    %c0_i32_0 = arith.constant 0 : i32
    %c0_i32_1 = arith.constant 0 : i32
    return %c0_i32, %c0_i32_0 : i32, i32
  }
  func.func @transform_3(%arg0: i32) -> (i32, i32) {
    %c0_i32 = arith.constant 0 : i32
    %c0_i32_0 = arith.constant 0 : i32
    return %arg0, %c0_i32 : i32, i32
  }
  func.func @transform_4(%arg0: i32) -> (i32, i32) {
    %c0_i32 = arith.constant 0 : i32
    %c0_i32_0 = arith.constant 0 : i32
    return %arg0, %c0_i32 : i32, i32
  }
  func.func @transform_5(%arg0: i32) -> (i32, i32) {
    %c0_i32 = arith.constant 0 : i32
    %c0_i32_0 = arith.constant 0 : i32
    return %arg0, %c0_i32 : i32, i32
  }
}

module attributes {stable_mosaic.version = 11 : i64} {
  func.func @_flash_attn_kernel(%arg0: i32, %arg1: i32, %arg2: i32, %arg3: memref<1x4x8x8xbf16, #tpu.memory_space<vmem>>, %arg4: memref<1x4x8x8xbf16, #tpu.memory_space<vmem>>, %arg5: memref<1x4x8x8xbf16, #tpu.memory_space<vmem>>, %arg6: memref<1x4x8x8xf32, #tpu.memory_space<vmem>>, %arg7: memref<4x8x1xf32, #tpu.memory_space<vmem>>, %arg8: memref<4x8x1xf32, #tpu.memory_space<vmem>>, %arg9: memref<4x8x8xf32, #tpu.memory_space<vmem>>) attributes {dimension_semantics = [#tpu.dimension_semantics<parallel>, #tpu.dimension_semantics<parallel>, #tpu.dimension_semantics<arbitrary>], iteration_bounds = array<i64: 2, 1, 1>, scalar_prefetch = 0 : i64, scratch_operands = 3 : i64, tpu.core_type = #tpu.core_type<tc>, window_params = [{transform_indices = @transform_0, window_bounds = array<i64: 1, 4, 8, 8>}, {transform_indices = @transform_1, window_bounds = array<i64: 1, 4, 8, 8>}, {transform_indices = @transform_2, window_bounds = array<i64: 1, 4, 8, 8>}, {transform_indices = @transform_3, window_bounds = array<i64: 1, 4, 8, 8>}]} {
    %c0_i32 = arith.constant 0 : i32
    %0 = arith.cmpi eq, %arg2, %c0_i32 : i32
    %1 = arith.extui %0 : i1 to i32
    %c0_i32_0 = arith.constant 0 : i32
    %2 = arith.cmpi ne, %1, %c0_i32_0 : i32
    scf.if %2 {
      %cst_35 = arith.constant 0xFF800000 : f32
      %36 = vector.broadcast %cst_35 : f32 to vector<4x8x1xf32>
      %c0_36 = arith.constant 0 : index
      %c0_37 = arith.constant 0 : index
      %c0_38 = arith.constant 0 : index
      %37 = vector.load %arg7[%c0_36, %c0_37, %c0_38] : memref<4x8x1xf32, #tpu.memory_space<vmem>>, vector<4x8x1xf32>
      tpu.vector_store %arg7[%c0_36, %c0_37, %c0_38], %36 {strides = array<i32>} : memref<4x8x1xf32, #tpu.memory_space<vmem>>, vector<4x8x1xf32>,
      %cst_39 = arith.constant 0.000000e+00 : f32
      %38 = vector.broadcast %cst_39 : f32 to vector<4x8x1xf32>
      %c0_40 = arith.constant 0 : index
      %c0_41 = arith.constant 0 : index
      %c0_42 = arith.constant 0 : index
      %39 = vector.load %arg8[%c0_40, %c0_41, %c0_42] : memref<4x8x1xf32, #tpu.memory_space<vmem>>, vector<4x8x1xf32>
      tpu.vector_store %arg8[%c0_40, %c0_41, %c0_42], %38 {strides = array<i32>} : memref<4x8x1xf32, #tpu.memory_space<vmem>>, vector<4x8x1xf32>,
      %cst_43 = arith.constant 0.000000e+00 : f32
      %40 = vector.broadcast %cst_43 : f32 to vector<4x8x8xf32>
      %c0_44 = arith.constant 0 : index
      %c0_45 = arith.constant 0 : index
      %c0_46 = arith.constant 0 : index
      %41 = vector.load %arg9[%c0_44, %c0_45, %c0_46] : memref<4x8x8xf32, #tpu.memory_space<vmem>>, vector<4x8x8xf32>
      tpu.vector_store %arg9[%c0_44, %c0_45, %c0_46], %40 {strides = array<i32>} : memref<4x8x8xf32, #tpu.memory_space<vmem>>, vector<4x8x8xf32>,
    } else {
    }
    %c0 = arith.constant 0 : index
    %c0_1 = arith.constant 0 : index
    %c0_2 = arith.constant 0 : index
    %c0_3 = arith.constant 0 : index
    %3 = vector.load %arg3[%c0, %c0_1, %c0_2, %c0_3] : memref<1x4x8x8xbf16, #tpu.memory_space<vmem>>, vector<1x4x8x8xbf16>
    %4 = vector.shape_cast %3 : vector<1x4x8x8xbf16> to vector<4x8x8xbf16>
    %c0_4 = arith.constant 0 : index
    %c0_5 = arith.constant 0 : index
    %c0_6 = arith.constant 0 : index
    %c0_7 = arith.constant 0 : index
    %5 = vector.load %arg4[%c0_4, %c0_5, %c0_6, %c0_7] : memref<1x4x8x8xbf16, #tpu.memory_space<vmem>>, vector<1x4x8x8xbf16>
    %6 = vector.shape_cast %5 : vector<1x4x8x8xbf16> to vector<4x8x8xbf16>
    %c0_8 = arith.constant 0 : index
    %c0_9 = arith.constant 0 : index
    %c0_10 = arith.constant 0 : index
    %c0_11 = arith.constant 0 : index
    %7 = vector.load %arg5[%c0_8, %c0_9, %c0_10, %c0_11] : memref<1x4x8x8xbf16, #tpu.memory_space<vmem>>, vector<1x4x8x8xbf16>
    %8 = vector.shape_cast %7 : vector<1x4x8x8xbf16> to vector<4x8x8xbf16>
    "tpu.trace_start"() <{level = 10 : i32, message = "hqe,hke->hqk"}> : () -> ()
    %cst = arith.constant dense<0.000000e+00> : vector<4x8x8xf32>
    %9 = tpu.matmul %4, %6, %cst {dimension_numbers = #tpu.dot_dimension_numbers<[2], [2], [1], [1], [0, 0, 0, 1, 1, 1], [0], [0]>} : vector<4x8x8xbf16>, vector<4x8x8xbf16>, vector<4x8x8xf32> -> vector<4x8x8xf32>
    "tpu.trace_stop"() : () -> ()
    %c0_12 = arith.constant 0 : index
    %c0_13 = arith.constant 0 : index
    %c0_14 = arith.constant 0 : index
    %10 = vector.load %arg7[%c0_12, %c0_13, %c0_14] : memref<4x8x1xf32, #tpu.memory_space<vmem>>, vector<4x8x1xf32>
    %cst_15 = arith.constant dense<0xFF800000> : vector<4x8xf32>
    %11 = vector.multi_reduction <maximumf>, %9, %cst_15 [2] : vector<4x8x8xf32> to vector<4x8xf32>
    %12 = vector.shape_cast %11 : vector<4x8xf32> to vector<4x8x1xf32>
    %13 = arith.maximumf %10, %12 : vector<4x8x1xf32>
    %14 = arith.subf %10, %13 : vector<4x8x1xf32>
    %15 = math.exp %14 : vector<4x8x1xf32>
    %16 = vector.broadcast %13 : vector<4x8x1xf32> to vector<4x8x8xf32>
    %17 = arith.subf %9, %16 : vector<4x8x8xf32>
    %18 = math.exp %17 : vector<4x8x8xf32>
    %c0_16 = arith.constant 0 : index
    %c0_17 = arith.constant 0 : index
    %c0_18 = arith.constant 0 : index
    %19 = vector.load %arg8[%c0_16, %c0_17, %c0_18] : memref<4x8x1xf32, #tpu.memory_space<vmem>>, vector<4x8x1xf32>
    %20 = arith.mulf %15, %19 : vector<4x8x1xf32>
    %cst_19 = arith.constant dense<0.000000e+00> : vector<4x8xf32>
    %21 = vector.multi_reduction <add>, %18, %cst_19 [2] : vector<4x8x8xf32> to vector<4x8xf32>
    %22 = vector.shape_cast %21 : vector<4x8xf32> to vector<4x8x1xf32>
    %23 = arith.addf %20, %22 : vector<4x8x1xf32>
    %c0_20 = arith.constant 0 : index
    %c0_21 = arith.constant 0 : index
    %c0_22 = arith.constant 0 : index
    %24 = vector.load %arg8[%c0_20, %c0_21, %c0_22] : memref<4x8x1xf32, #tpu.memory_space<vmem>>, vector<4x8x1xf32>
    tpu.vector_store %arg8[%c0_20, %c0_21, %c0_22], %23 {strides = array<i32>} : memref<4x8x1xf32, #tpu.memory_space<vmem>>, vector<4x8x1xf32>,
    %c0_23 = arith.constant 0 : index
    %c0_24 = arith.constant 0 : index
    %c0_25 = arith.constant 0 : index
    %25 = vector.load %arg9[%c0_23, %c0_24, %c0_25] : memref<4x8x8xf32, #tpu.memory_space<vmem>>, vector<4x8x8xf32>
    %26 = vector.broadcast %15 : vector<4x8x1xf32> to vector<4x8x8xf32>
    %27 = arith.mulf %26, %25 : vector<4x8x8xf32>
    %28 = arith.truncf %18 : vector<4x8x8xf32> to vector<4x8x8xbf16>
    "tpu.trace_start"() <{level = 10 : i32, message = "hqk,hke->hqe"}> : () -> ()
    %cst_26 = arith.constant dense<0.000000e+00> : vector<4x8x8xf32>
    %29 = tpu.matmul %28, %8, %cst_26 {dimension_numbers = #tpu.dot_dimension_numbers<[2], [1], [1], [2], [0, 0, 0, 1, 1, 2], [0], [0]>} : vector<4x8x8xbf16>, vector<4x8x8xbf16>, vector<4x8x8xf32> -> vector<4x8x8xf32>
    "tpu.trace_stop"() : () -> ()
    %30 = arith.addf %27, %29 : vector<4x8x8xf32>
    %c0_27 = arith.constant 0 : index
    %c0_28 = arith.constant 0 : index
    %c0_29 = arith.constant 0 : index
    %31 = vector.load %arg9[%c0_27, %c0_28, %c0_29] : memref<4x8x8xf32, #tpu.memory_space<vmem>>, vector<4x8x8xf32>
    tpu.vector_store %arg9[%c0_27, %c0_28, %c0_29], %30 {strides = array<i32>} : memref<4x8x8xf32, #tpu.memory_space<vmem>>, vector<4x8x8xf32>,
    %c0_30 = arith.constant 0 : index
    %c0_31 = arith.constant 0 : index
    %c0_32 = arith.constant 0 : index
    %32 = vector.load %arg7[%c0_30, %c0_31, %c0_32] : memref<4x8x1xf32, #tpu.memory_space<vmem>>, vector<4x8x1xf32>
    tpu.vector_store %arg7[%c0_30, %c0_31, %c0_32], %13 {strides = array<i32>} : memref<4x8x1xf32, #tpu.memory_space<vmem>>, vector<4x8x1xf32>,
    %c0_i32_33 = arith.constant 0 : i32
    %33 = arith.cmpi eq, %arg2, %c0_i32_33 : i32
    %34 = arith.extui %33 : i1 to i32
    %c0_i32_34 = arith.constant 0 : i32
    %35 = arith.cmpi ne, %34, %c0_i32_34 : i32
    scf.if %35 {
      %c0_35 = arith.constant 0 : index
      %c0_36 = arith.constant 0 : index
      %c0_37 = arith.constant 0 : index
      %36 = vector.load %arg8[%c0_35, %c0_36, %c0_37] : memref<4x8x1xf32, #tpu.memory_space<vmem>>, vector<4x8x1xf32>
      %37 = tpu.reciprocal %36 : vector<4x8x1xf32> -> vector<4x8x1xf32>
      %c0_38 = arith.constant 0 : index
      %c0_39 = arith.constant 0 : index
      %c0_40 = arith.constant 0 : index
      %38 = vector.load %arg9[%c0_38, %c0_39, %c0_40] : memref<4x8x8xf32, #tpu.memory_space<vmem>>, vector<4x8x8xf32>
      %39 = vector.broadcast %37 : vector<4x8x1xf32> to vector<4x8x8xf32>
      %40 = arith.mulf %38, %39 : vector<4x8x8xf32>
      %c0_41 = arith.constant 0 : index
      %c0_42 = arith.constant 0 : index
      %c0_43 = arith.constant 0 : index
      %c0_44 = arith.constant 0 : index
      %41 = vector.load %arg6[%c0_41, %c0_42, %c0_43, %c0_44] : memref<1x4x8x8xf32, #tpu.memory_space<vmem>>, vector<1x4x8x8xf32>
      %42 = vector.shape_cast %41 : vector<1x4x8x8xf32> to vector<4x8x8xf32>
      %43 = vector.shape_cast %40 : vector<4x8x8xf32> to vector<1x4x8x8xf32>
      tpu.vector_store %arg6[%c0_41, %c0_42, %c0_43, %c0_44], %43 {strides = array<i32>} : memref<1x4x8x8xf32, #tpu.memory_space<vmem>>, vector<1x4x8x8xf32>,
    } else {
    }
    return
  }
  func.func @transform_0(%arg0: i32, %arg1: i32, %arg2: i32) -> (i32, i32, i32, i32) {
    %c0_i32 = arith.constant 0 : i32
    %c0_i32_0 = arith.constant 0 : i32
    %c0_i32_1 = arith.constant 0 : i32
    return %arg0, %c0_i32, %arg1, %c0_i32_0 : i32, i32, i32, i32
  }
  func.func @transform_1(%arg0: i32, %arg1: i32, %arg2: i32) -> (i32, i32, i32, i32) {
    %c0_i32 = arith.constant 0 : i32
    %c0_i32_0 = arith.constant 0 : i32
    %c0_i32_1 = arith.constant 0 : i32
    return %arg0, %c0_i32, %arg2, %c0_i32_0 : i32, i32, i32, i32
  }
  func.func @transform_2(%arg0: i32, %arg1: i32, %arg2: i32) -> (i32, i32, i32, i32) {
    %c0_i32 = arith.constant 0 : i32
    %c0_i32_0 = arith.constant 0 : i32
    %c0_i32_1 = arith.constant 0 : i32
    return %arg0, %c0_i32, %arg2, %c0_i32_0 : i32, i32, i32, i32
  }
  func.func @transform_3(%arg0: i32, %arg1: i32, %arg2: i32) -> (i32, i32, i32, i32) {
    %c0_i32 = arith.constant 0 : i32
    %c0_i32_0 = arith.constant 0 : i32
    %c0_i32_1 = arith.constant 0 : i32
    return %arg0, %c0_i32, %arg1, %c0_i32_0 : i32, i32, i32, i32
  }
}

</mosaic_0001>

<llo_original>
// kernel: self_attention.2
$region0: #{self_attention.2}
  #allocation0 [shape = 'u32[]', space=smem, size = 0x4, offset = 0x4, fixed_abs, tag = 'smem constant byte address 0x4 - core index']
  #allocation1 [shape = 'u32[72,128]{1,0:T(1,128)}', space=vmem, size = 0x9000, scoped, tag = 'internal scratch']
  %s0 = inlined_call_operand.vmem [shape: bf16[16,32], index: 0, kind: input, shape index: {}]
  %s1 = inlined_call_operand.vmem [shape: bf16[32,96], index: 1, kind: input, shape index: {}]
  %s2 = inlined_call_operand.vmem [shape: f32[1,96], index: 2, kind: input, shape index: {}]
  %s3 = inlined_call_operand.vmem [shape: bf16[16,32], index: 3, kind: output, shape index: {0}]
  %s4 = inlined_call_operand.vmem [shape: bf16[16,32], index: 4, kind: output, shape index: {1}]
  %s5 = inlined_call_operand.vmem [shape: bf16[16,32], index: 5, kind: output, shape index: {2}]
  %6 = xla_tuple %s3, %s4, %s5
  %s7 = sld [smem:[#allocation0]]
  $region38: #{self_attention.2} parent=0
    _
  %s9 = ssub.s32 1, %s7
  %s10 = scalar_select 0, %s9, %s7
  // Predicated region
  $region2: #{self_attention.2} parent=0 // pred_check
    _
  $region3: #{self_attention.2} parent=0 // pred_check_branch
    %12 = sbr.rel (0) target = $region5
  $region4: #{self_attention.2} parent=0 // pred_region
    _
  $region5: #{self_attention.2} parent=0 // pred_fallthru
    _
  // Predicated region
  $region6: #{self_attention.2} parent=0 // pred_check
    _
  $region7: #{self_attention.2} parent=0 // pred_check_branch
    %14 = sbr.rel (0) target = $region9
  $region8: #{self_attention.2} parent=0 // pred_region
    _
  $region9: #{self_attention.2} parent=0 // pred_fallthru
    _
  // Predicated region
  $region10: #{self_attention.2} parent=0 // pred_check
    _
  $region11: #{self_attention.2} parent=0 // pred_check_branch
    %16 = sbr.rel (0) target = $region13
  $region12: #{self_attention.2} parent=0 // pred_region
    _
  $region13: #{self_attention.2} parent=0 // pred_fallthru
    _
  %v18 = vld [vmem:[%s0] sm:$0xf]
  %v19 = vld [vmem:[%s0 + $0x4] sm:$0xf]
  %v20 = vld [vmem:[%s1] sm:$0xf]
  %v21 = vld [vmem:[%s1 + $0x4] sm:$0xf]
  %v22 = vld [vmem:[%s1 + $0x8] sm:$0xf]
  %v23 = vld [vmem:[%s1 + $0xc] sm:$0xf]
  %v24 = vld [vmem:[%s2] sm:$0x1]
  %v26 = vperm.slane %v24, 0
  %v30 = vunpack.c.l.b16 %v18
  %v31 = vunpack.c.l.b16 %v19
  %v32 = vpack.c.b16 %v31, %v30
  %v37 = vunpack.c.l.b16 %v20
  %v38 = vunpack.c.l.b16 %v21
  %v39 = vunpack.c.l.b16 %v22
  %v40 = vunpack.c.l.b16 %v23
  %v41 = vpack.c.b16 %v38, %v37
  %v42 = vpack.c.b16 %v40, %v39
  %vm45 = vcmask 261120
  %v47 = vsel %vm45, %v32, 0
  %49 = vmatpush.bf16.msra.mxu0 0
  %50 = vmatpush.bf16.msra.mxu0 0
  %51 = vmatpush.bf16.msra.mxu0 0
  %52 = vmatpush.bf16.msra.mxu0 0
  %53 = vmatpush.bf16.msra.mxu0 0
  %54 = vmatpush.bf16.msra.mxu0 0
  %55 = vmatpush.bf16.msra.mxu0 %v42
  %56 = vmatpush.bf16.msra.mxu0 %v41
  %57 = vmatmul.bf16.gmra.mxu0 %v47
  %v58 = vpop.f32.mrf.mxu0
  %v59 = vadd.f32 %v26, %v58
  %v60 = vpop.f32.mrf.mxu0
  %v61 = vadd.f32 %v26, %v60
  %62 = vdwg.mxu0
  %v63 = vpack.c.bf16 %v59, %v59
  %v64 = vpack.c.bf16 %v61, %v61
  %vm65 = vcmask 257024
  %66 = vst.msk [vmem:[%s3] sm:$0xf] %vm65, %v63
  %67 = vst.msk [vmem:[%s3 + $0x4] sm:$0xf] %vm65, %v64
  %70 = vrot.lane.b32.xlu0 %v63, 96
  %v71 = vpop.permute.xlu0 %70
  %72 = vrot.lane.b32.xlu0 %v64, 96
  %v73 = vpop.permute.xlu0 %72
  %76 = vst.msk [vmem:[%s4] sm:$0xf] %vm65, %v71
  %77 = vst.msk [vmem:[%s4 + $0x4] sm:$0xf] %vm65, %v73
  %78 = vrot.lane.b32.xlu0 %v63, 64
  %v79 = vpop.permute.xlu0 %78
  %80 = vrot.lane.b32.xlu0 %v64, 64
  %v81 = vpop.permute.xlu0 %80
  %84 = vst.msk [vmem:[%s5] sm:$0xf] %vm65, %v79
  %85 = vst.msk [vmem:[%s5 + $0x4] sm:$0xf] %vm65, %v81
  // Predicated region
  $region14: #{self_attention.2} parent=0 // pred_check
    _
  $region15: #{self_attention.2} parent=0 // pred_check_branch
    %87 = sbr.rel (0) target = $region17
  $region16: #{self_attention.2} parent=0 // pred_region
    _
  $region17: #{self_attention.2} parent=0 // pred_fallthru
    _
  // Predicated region
  $region18: #{self_attention.2} parent=0 // pred_check
    _
  $region19: #{self_attention.2} parent=0 // pred_check_branch
    %89 = sbr.rel (0) target = $region21
  $region20: #{self_attention.2} parent=0 // pred_region
    _
  $region21: #{self_attention.2} parent=0 // pred_fallthru
    _
  // Predicated region
  $region22: #{self_attention.2} parent=0 // pred_check
    _
  $region23: #{self_attention.2} parent=0 // pred_check_branch
    %91 = sbr.rel (0) target = $region25
  $region24: #{self_attention.2} parent=0 // pred_region
    _
  $region25: #{self_attention.2} parent=0 // pred_fallthru
    _
  // Predicated region
  $region26: #{self_attention.2} parent=0 // pred_check
    _
  $region27: #{self_attention.2} parent=0 // pred_check_branch
    %93 = sbr.rel (0) target = $region29
  $region28: #{self_attention.2} parent=0 // pred_region
    _
  $region29: #{self_attention.2} parent=0 // pred_fallthru
    _
  // Predicated region
  $region30: #{self_attention.2} parent=0 // pred_check
    _
  $region31: #{self_attention.2} parent=0 // pred_check_branch
    %95 = sbr.rel (0) target = $region33
  $region32: #{self_attention.2} parent=0 // pred_region
    _
  $region33: #{self_attention.2} parent=0 // pred_fallthru
    _
  // Predicated region
  $region34: #{self_attention.2} parent=0 // pred_check
    _
  $region35: #{self_attention.2} parent=0 // pred_check_branch
    %97 = sbr.rel (0) target = $region37
  $region36: #{self_attention.2} parent=0 // pred_region
    _
  $region37: #{self_attention.2} parent=0 // pred_fallthru
    _

// kernel: self_attention.3
$region0: #{self_attention.3}
  #allocation0 [shape = 'u32[]', space=smem, size = 0x4, offset = 0x4, fixed_abs, tag = 'smem constant byte address 0x4 - core index']
  #allocation1 [shape = 'u32[72,128]{1,0:T(1,128)}', space=vmem, size = 0x9000, scoped, tag = 'internal scratch']
  #allocation2 [shape = 'f32[4,8,1]{2,1,0:T(8,128)}', space=vmem, size = 0x4000, scoped, tag = 'scratch operand']
  #allocation3 [shape = 'f32[4,8,1]{2,1,0:T(8,128)}', space=vmem, size = 0x4000, scoped, tag = 'scratch operand']
  #allocation4 [shape = 'f32[4,8,8]{2,1,0:T(8,128)}', space=vmem, size = 0x4000, scoped, tag = 'scratch operand']
  %s0 = inlined_call_operand.vmem [shape: bf16[2,4,8,8], index: 0, kind: input, shape index: {}]
  %s1 = inlined_call_operand.vmem [shape: bf16[2,4,8,8], index: 1, kind: input, shape index: {}]
  %s2 = inlined_call_operand.vmem [shape: bf16[2,4,8,8], index: 2, kind: input, shape index: {}]
  %s3 = inlined_call_operand.vmem [shape: f32[2,4,8,8], index: 3, kind: output, shape index: {}]
  %s4 = sld [smem:[#allocation0]]
  $region53: #{self_attention.3} parent=0
    _
  %s6 = ssub.s32 1, %s4
  %s7 = scalar_select 0, %s6, %s4
  loop: start=0, step=1, limit=4
  $region2: #{self_attention.3} parent=0 // loop_pre_header
    _
  $region3: #{self_attention.3} parent=0 // loop_header
    %s9 = sphi 0, %s13
    %p10 = scmp.ge.s32.totalorder %s9, 4
    %s16 = sphi 0, %s35
    %s17 = sphi 0, %s31
    %s18 = sphi 0, %s27
    %s19 = sphi 0, %s16
    %s20 = sphi 0, %s17
    %s21 = sphi 0, %s18
    %s22 = sphi 0, %s19
    %s23 = sphi 0, %s20
    %s24 = sphi 0, %s21
    %s40 = sphi 0, %s42
    %s43 = sphi 0, %s40
    %s44 = sphi 0, %s43
    %s60 = sphi 0, %s44
    %s68 = sphi 0, %s70
    %s71 = sphi 0, %s68
    %s72 = sphi 0, %s71
    %s88 = sphi 0, %s72
    %s96 = sphi 0, %s98
    %s99 = sphi 0, %s96
    %s100 = sphi 0, %s99
    %s116 = sphi 0, %s100
    %s124 = sphi 0, %s126
    %s127 = sphi 0, %s124
    %s128 = sphi 0, %s127
    %s144 = sphi 0, %s128
  $region4: #{self_attention.3} parent=0 // loop_header_branch
    %12 = sbr.rel (%p10) target = $region8
  $region5: #{self_attention.3} parent=0 // loop_body
    %s14 = ssub.s32 %s9, 1
    %s15 = ssub.s32 %s9, 2
    %s25 = sadd.s32 1, %s18
    %p26 = scmp.ge.s32.totalorder %s25, 1
    %s27 = scalar_select %p26, 0, %s25
    %s28 = sadd.s32 1, %s17
    %s29 = scalar_select %p26, %s28, %s17
    %p30 = scmp.ge.s32.totalorder %s29, 1
    %s31 = scalar_select %p30, 0, %s29
    %s32 = sadd.s32 1, %s16
    %s33 = scalar_select %p30, %s32, %s16
    %p34 = scmp.ge.s32.totalorder %s33, 2
    %s35 = scalar_select %p34, 0, %s33
    %s36 = ssub.s32 %s16, %s35
    %s37 = ssub.s32 %s17, %s31
    %s38 = sor.u32 %s36, %s37
    %p39 = scmp.eq.s32.totalorder %s38, 0
    %s41 = sadd.s32 %s40, 1
    %s42 = scalar_select %p39, %s40, %s41
    %p45 = pneg %p39
    %p46 = scmp.eq.s32.totalorder %s9, 1
    %p47 = por %p45, %p46
    %p48 = scmp.ne.s32.totalorder %s40, %s43
    %p49 = scmp.eq.s32.totalorder %s9, 0
    %p50 = por %p48, %p49
    %p51 = scmp.ne.s32.totalorder %s40, %s43
    %p52 = scmp.eq.s32.totalorder %s14, 1
    %p53 = por %p51, %p52
    %p54 = scmp.ne.s32.totalorder %s43, %s44
    %p55 = scmp.eq.s32.totalorder %s14, 0
    %p56 = por %p54, %p55
    %p57 = scmp.ne.s32.totalorder %s43, %s44
    %p58 = scmp.eq.s32.totalorder %s15, 1
    %p59 = por %p57, %p58
    %p61 = scmp.ne.s32.totalorder %s44, %s60
    %p62 = scmp.eq.s32.totalorder %s15, 0
    %p63 = por %p61, %p62
    %s64 = ssub.s32 %s16, %s35
    %s65 = ssub.s32 %s18, %s27
    %s66 = sor.u32 %s64, %s65
    %p67 = scmp.eq.s32.totalorder %s66, 0
    %s69 = sadd.s32 %s68, 1
    %s70 = scalar_select %p67, %s68, %s69
    %p73 = pneg %p67
    %p74 = scmp.eq.s32.totalorder %s9, 1
    %p75 = por %p73, %p74
    %p76 = scmp.ne.s32.totalorder %s68, %s71
    %p77 = scmp.eq.s32.totalorder %s9, 0
    %p78 = por %p76, %p77
    %p79 = scmp.ne.s32.totalorder %s68, %s71
    %p80 = scmp.eq.s32.totalorder %s14, 1
    %p81 = por %p79, %p80
    %p82 = scmp.ne.s32.totalorder %s71, %s72
    %p83 = scmp.eq.s32.totalorder %s14, 0
    %p84 = por %p82, %p83
    %p85 = scmp.ne.s32.totalorder %s71, %s72
    %p86 = scmp.eq.s32.totalorder %s15, 1
    %p87 = por %p85, %p86
    %p89 = scmp.ne.s32.totalorder %s72, %s88
    %p90 = scmp.eq.s32.totalorder %s15, 0
    %p91 = por %p89, %p90
    %s92 = ssub.s32 %s16, %s35
    %s93 = ssub.s32 %s18, %s27
    %s94 = sor.u32 %s92, %s93
    %p95 = scmp.eq.s32.totalorder %s94, 0
    %s97 = sadd.s32 %s96, 1
    %s98 = scalar_select %p95, %s96, %s97
    %p101 = pneg %p95
    %p102 = scmp.eq.s32.totalorder %s9, 1
    %p103 = por %p101, %p102
    %p104 = scmp.ne.s32.totalorder %s96, %s99
    %p105 = scmp.eq.s32.totalorder %s9, 0
    %p106 = por %p104, %p105
    %p107 = scmp.ne.s32.totalorder %s96, %s99
    %p108 = scmp.eq.s32.totalorder %s14, 1
    %p109 = por %p107, %p108
    %p110 = scmp.ne.s32.totalorder %s99, %s100
    %p111 = scmp.eq.s32.totalorder %s14, 0
    %p112 = por %p110, %p111
    %p113 = scmp.ne.s32.totalorder %s99, %s100
    %p114 = scmp.eq.s32.totalorder %s15, 1
    %p115 = por %p113, %p114
    %p117 = scmp.ne.s32.totalorder %s100, %s116
    %p118 = scmp.eq.s32.totalorder %s15, 0
    %p119 = por %p117, %p118
    %s120 = ssub.s32 %s16, %s35
    %s121 = ssub.s32 %s17, %s31
    %s122 = sor.u32 %s120, %s121
    %p123 = scmp.eq.s32.totalorder %s122, 0
    %s125 = sadd.s32 %s124, 1
    %s126 = scalar_select %p123, %s124, %s125
    %p129 = pneg %p123
    %p130 = scmp.eq.s32.totalorder %s9, 1
    %p131 = por %p129, %p130
    %p132 = scmp.ne.s32.totalorder %s124, %s127
    %p133 = scmp.eq.s32.totalorder %s9, 0
    %p134 = por %p132, %p133
    %p135 = scmp.ne.s32.totalorder %s124, %s127
    %p136 = scmp.eq.s32.totalorder %s14, 1
    %p137 = por %p135, %p136
    %p138 = scmp.ne.s32.totalorder %s127, %s128
    %p139 = scmp.eq.s32.totalorder %s14, 0
    %p140 = por %p138, %p139
    %p141 = scmp.ne.s32.totalorder %s127, %s128
    %p142 = scmp.eq.s32.totalorder %s15, 1
    %p143 = por %p141, %p142
    %p145 = scmp.ne.s32.totalorder %s128, %s144
    %p146 = scmp.eq.s32.totalorder %s15, 0
    %p147 = por %p145, %p146
    %p148 = scmp.le.s32.totalorder 1, %s9
    %p149 = scmp.lt.s32.totalorder %s9, 3
    %p150 = pnand %p148, %p149
    %p151 = pneg %p150
    // Predicated region
    $region9: #{self_attention.3} parent=5 // pred_check
      _
    $region10: #{self_attention.3} parent=5 // pred_check_branch
      %153 = sbr.rel (%p150) target = $region12
    $region11: #{self_attention.3} parent=5 // pred_region
      %s154 = ssub.s32 %s9, 1
    $region12: #{self_attention.3} parent=5 // pred_fallthru
      _
    %p155 = scmp.lt.s32.totalorder %s9, 2
    // Predicated region
    $region13: #{self_attention.3} parent=5 // pred_check
      %p156 = pneg %p155
    $region14: #{self_attention.3} parent=5 // pred_check_branch
      %158 = sbr.rel (%p156) target = $region16
    $region15: #{self_attention.3} parent=5 // pred_region
      // Predicated region
      $region17: #{self_attention.3} parent=15 // pred_check
        %p159 = pneg %p50
      $region18: #{self_attention.3} parent=15 // pred_check_branch
        %161 = sbr.rel (%p159) target = $region20
      $region19: #{self_attention.3} parent=15 // pred_region
        %p162 = scmp.lt.s32.totalorder %s16, 1
        %s163 = scalar_select %p162, %s16, 1
        %p164 = scmp.lt.s32.totalorder %s17, 0
        %s165 = scalar_select %p164, %s17, 0
        %s166 = smul.addr %s163, 4
        %s167 = sadd.s32 %s165, %s166
        %s168 = smul.addr %s167, 4
        %s169 = scalar_lea.vmem %s0, %s168
      $region20: #{self_attention.3} parent=15 // pred_fallthru
        _
      // Predicated region
      $region21: #{self_attention.3} parent=15 // pred_check
        %p170 = pneg %p78
      $region22: #{self_attention.3} parent=15 // pred_check_branch
        %172 = sbr.rel (%p170) target = $region24
      $region23: #{self_attention.3} parent=15 // pred_region
        %p173 = scmp.lt.s32.totalorder %s16, 1
        %s174 = scalar_select %p173, %s16, 1
        %p175 = scmp.lt.s32.totalorder %s18, 0
        %s176 = scalar_select %p175, %s18, 0
        %s177 = smul.addr %s174, 4
        %s178 = sadd.s32 %s176, %s177
        %s179 = smul.addr %s178, 4
        %s180 = scalar_lea.vmem %s1, %s179
      $region24: #{self_attention.3} parent=15 // pred_fallthru
        _
      // Predicated region
      $region25: #{self_attention.3} parent=15 // pred_check
        %p181 = pneg %p106
      $region26: #{self_attention.3} parent=15 // pred_check_branch
        %183 = sbr.rel (%p181) target = $region28
      $region27: #{self_attention.3} parent=15 // pred_region
        %p184 = scmp.lt.s32.totalorder %s16, 1
        %s185 = scalar_select %p184, %s16, 1
        %p186 = scmp.lt.s32.totalorder %s18, 0
        %s187 = scalar_select %p186, %s18, 0
        %s188 = smul.addr %s185, 4
        %s189 = sadd.s32 %s187, %s188
        %s190 = smul.addr %s189, 4
        %s191 = scalar_lea.vmem %s2, %s190
      $region28: #{self_attention.3} parent=15 // pred_fallthru
        _
    $region16: #{self_attention.3} parent=5 // pred_fallthru
      _
    %p192 = scmp.le.s32.totalorder 1, %s9
    %p193 = scmp.lt.s32.totalorder %s9, 3
    %p194 = pnand %p192, %p193
    %p195 = pneg %p194
    // Predicated region
    $region29: #{self_attention.3} parent=5 // pred_check
      _
    $region30: #{self_attention.3} parent=5 // pred_check_branch
      %197 = sbr.rel (%p194) target = $region32
    $region31: #{self_attention.3} parent=5 // pred_region
      %s198 = ssub.s32 %s9, 1
      %p199 = scmp.lt.s32.totalorder %s19, 1
      %s200 = scalar_select %p199, %s19, 1
      %p201 = scmp.lt.s32.totalorder %s20, 0
      %s202 = scalar_select %p201, %s20, 0
      %s203 = smul.addr %s200, 4
      %s204 = sadd.s32 %s202, %s203
      %s205 = smul.addr %s204, 4
      %s206 = scalar_lea.vmem %s0, %s205
      %p207 = pneg %p56
      %p208 = pneg %p53
      %p209 = scmp.lt.s32.totalorder %s19, 1
      %s210 = scalar_select %p209, %s19, 1
      %p211 = scmp.lt.s32.totalorder %s21, 0
      %s212 = scalar_select %p211, %s21, 0
      %s213 = smul.addr %s210, 4
      %s214 = sadd.s32 %s212, %s213
      %s215 = smul.addr %s214, 4
      %s216 = scalar_lea.vmem %s1, %s215
      %p217 = pneg %p84
      %p218 = pneg %p81
      %p219 = scmp.lt.s32.totalorder %s19, 1
      %s220 = scalar_select %p219, %s19, 1
      %p221 = scmp.lt.s32.totalorder %s21, 0
      %s222 = scalar_select %p221, %s21, 0
      %s223 = smul.addr %s220, 4
      %s224 = sadd.s32 %s222, %s223
      %s225 = smul.addr %s224, 4
      %s226 = scalar_lea.vmem %s2, %s225
      %p227 = pneg %p112
      %p228 = pneg %p109
      %p229 = pneg %p140
      %p230 = pneg %p137
      %p231 = scmp.lt.s32.totalorder %s19, 1
      %s232 = scalar_select %p231, %s19, 1
      %p233 = scmp.lt.s32.totalorder %s20, 0
      %s234 = scalar_select %p233, %s20, 0
      %s235 = smul.addr %s232, 4
      %s236 = sadd.s32 %s234, %s235
      %s237 = smul.addr %s236, 8
      %s238 = scalar_lea.vmem %s3, %s237
      %p239 = scmp.lt.s32.totalorder %s19, 1
      %s240 = scalar_select %p239, %s19, 1
      %p241 = scmp.lt.s32.totalorder %s20, 0
      %s242 = scalar_select %p241, %s20, 0
      %s243 = smul.addr %s240, 4
      %s244 = sadd.s32 %s242, %s243
      %s245 = smul.addr %s244, 4
      %s246 = scalar_lea.vmem %s0, %s245
      %p247 = scmp.lt.s32.totalorder %s19, 1
      %s248 = scalar_select %p247, %s19, 1
      %p249 = scmp.lt.s32.totalorder %s21, 0
      %s250 = scalar_select %p249, %s21, 0
      %s251 = smul.addr %s248, 4
      %s252 = sadd.s32 %s250, %s251
      %s253 = smul.addr %s252, 4
      %s254 = scalar_lea.vmem %s1, %s253
      %p255 = scmp.lt.s32.totalorder %s19, 1
      %s256 = scalar_select %p255, %s19, 1
      %p257 = scmp.lt.s32.totalorder %s21, 0
      %s258 = scalar_select %p257, %s21, 0
      %s259 = smul.addr %s256, 4
      %s260 = sadd.s32 %s258, %s259
      %s261 = smul.addr %s260, 4
      %s262 = scalar_lea.vmem %s2, %s261
      %p263 = scmp.lt.s32.totalorder %s19, 1
      %s264 = scalar_select %p263, %s19, 1
      %p265 = scmp.lt.s32.totalorder %s20, 0
      %s266 = scalar_select %p265, %s20, 0
      %s267 = smul.addr %s264, 4
      %s268 = sadd.s32 %s266, %s267
      %s269 = smul.addr %s268, 8
      %s270 = scalar_lea.vmem %s3, %s269
      %p272 = scmp.eq.s32.totalorder %s21, 0
      // Predicated region
      $region33: #{self_attention.3} parent=31 // pred_check
        %p273 = pneg %p272
      $region34: #{self_attention.3} parent=31 // pred_check_branch
        %275 = sbr.rel (%p273) target = $region36
      $region35: #{self_attention.3} parent=31 // pred_region
        %vm276 = vcmask 7168
        %277 = vst.msk [vmem:[#allocation2] sm:$0xff] %vm276, -inf
        %278 = vst.msk [vmem:[#allocation2 + $0x8] sm:$0xff] %vm276, -inf
        %279 = vst.msk [vmem:[#allocation2 + $0x10] sm:$0xff] %vm276, -inf
        %280 = vst.msk [vmem:[#allocation2 + $0x18] sm:$0xff] %vm276, -inf
        %281 = vst.msk [vmem:[#allocation3] sm:$0xff] %vm276, 0.0
        %282 = vst.msk [vmem:[#allocation3 + $0x8] sm:$0xff] %vm276, 0.0
        %283 = vst.msk [vmem:[#allocation3 + $0x10] sm:$0xff] %vm276, 0.0
        %284 = vst.msk [vmem:[#allocation3 + $0x18] sm:$0xff] %vm276, 0.0
        %vm285 = vcmask 64512
        %286 = vst.msk [vmem:[#allocation4] sm:$0xff] %vm285, 0.0
        %287 = vst.msk [vmem:[#allocation4 + $0x8] sm:$0xff] %vm285, 0.0
        %288 = vst.msk [vmem:[#allocation4 + $0x10] sm:$0xff] %vm285, 0.0
        %289 = vst.msk [vmem:[#allocation4 + $0x18] sm:$0xff] %vm285, 0.0
      $region36: #{self_attention.3} parent=31 // pred_fallthru
        _
      %v290 = vld [vmem:[%s246] sm:$0xf]
      %v291 = vld [vmem:[%s246 + $0x4] sm:$0xf]
      %v292 = vld [vmem:[%s246 + $0x8] sm:$0xf]
      %v293 = vld [vmem:[%s246 + $0xc] sm:$0xf]
      %v294 = vld [vmem:[%s254] sm:$0xf]
      %v295 = vld [vmem:[%s254 + $0x4] sm:$0xf]
      %v296 = vld [vmem:[%s254 + $0x8] sm:$0xf]
      %v297 = vld [vmem:[%s254 + $0xc] sm:$0xf]
      %v298 = vld [vmem:[%s262] sm:$0xf]
      %v299 = vld [vmem:[%s262 + $0x4] sm:$0xf]
      %v300 = vld [vmem:[%s262 + $0x8] sm:$0xf]
      %v301 = vld [vmem:[%s262 + $0xc] sm:$0xf]
      %vm302 = vcmask 64512
      %v304 = vsel %vm302, %v290, 0
      %v307 = vsel %vm302, %v294, 0
      %309 = vmatpush.bf16.xpose.msra.mxu0 0
      %310 = vmatpush.bf16.xpose.msra.mxu0 0
      %311 = vmatpush.bf16.xpose.msra.mxu0 0
      %312 = vmatpush.bf16.xpose.msra.mxu0 0
      %313 = vmatpush.bf16.xpose.msra.mxu0 0
      %314 = vmatpush.bf16.xpose.msra.mxu0 0
      %315 = vmatpush.bf16.xpose.msra.mxu0 0
      %316 = vmatpush.bf16.xpose.msra.mxu0 %v307
      %317 = vmatmul.bf16.gmra.mxu0 %v304
      %v318 = vpop.f32.mrf.mxu0
      %v319 = vadd.f32 0.0, %v318
      %v320 = vpop.f32.mrf.mxu0
      %321 = vdwg.mxu0
      %v323 = vsel %vm302, %v291, 0
      %v326 = vsel %vm302, %v295, 0
      %328 = vmatpush.bf16.xpose.msra.mxu0 0
      %329 = vmatpush.bf16.xpose.msra.mxu0 0
      %330 = vmatpush.bf16.xpose.msra.mxu0 0
      %331 = vmatpush.bf16.xpose.msra.mxu0 0
      %332 = vmatpush.bf16.xpose.msra.mxu0 0
      %333 = vmatpush.bf16.xpose.msra.mxu0 0
      %334 = vmatpush.bf16.xpose.msra.mxu0 0
      %335 = vmatpush.bf16.xpose.msra.mxu0 %v326
      %336 = vmatmul.bf16.gmra.mxu0 %v323
      %v337 = vpop.f32.mrf.mxu0
      %v338 = vadd.f32 0.0, %v337
      %v339 = vpop.f32.mrf.mxu0
      %340 = vdwg.mxu0
      %v342 = vsel %vm302, %v292, 0
      %v345 = vsel %vm302, %v296, 0
      %347 = vmatpush.bf16.xpose.msra.mxu0 0
      %348 = vmatpush.bf16.xpose.msra.mxu0 0
      %349 = vmatpush.bf16.xpose.msra.mxu0 0
      %350 = vmatpush.bf16.xpose.msra.mxu0 0
      %351 = vmatpush.bf16.xpose.msra.mxu0 0
      %352 = vmatpush.bf16.xpose.msra.mxu0 0
      %353 = vmatpush.bf16.xpose.msra.mxu0 0
      %354 = vmatpush.bf16.xpose.msra.mxu0 %v345
      %355 = vmatmul.bf16.gmra.mxu0 %v342
      %v356 = vpop.f32.mrf.mxu0
      %v357 = vadd.f32 0.0, %v356
      %v358 = vpop.f32.mrf.mxu0
      %359 = vdwg.mxu0
      %v361 = vsel %vm302, %v293, 0
      %v364 = vsel %vm302, %v297, 0
      %366 = vmatpush.bf16.xpose.msra.mxu0 0
      %367 = vmatpush.bf16.xpose.msra.mxu0 0
      %368 = vmatpush.bf16.xpose.msra.mxu0 0
      %369 = vmatpush.bf16.xpose.msra.mxu0 0
      %370 = vmatpush.bf16.xpose.msra.mxu0 0
      %371 = vmatpush.bf16.xpose.msra.mxu0 0
      %372 = vmatpush.bf16.xpose.msra.mxu0 0
      %373 = vmatpush.bf16.xpose.msra.mxu0 %v364
      %374 = vmatmul.bf16.gmra.mxu0 %v361
      %v375 = vpop.f32.mrf.mxu0
      %v376 = vadd.f32 0.0, %v375
      %v377 = vpop.f32.mrf.mxu0
      %378 = vdwg.mxu0
      %v379 = vld [vmem:[#allocation2] sm:$0xff]
      %v380 = vld [vmem:[#allocation2 + $0x8] sm:$0xff]
      %v381 = vld [vmem:[#allocation2 + $0x10] sm:$0xff]
      %v382 = vld [vmem:[#allocation2 + $0x18] sm:$0xff]
      %v383 = vsel %vm302, %v319, -inf
      %384 = vmax.xlane.f32.xlu0 %v383
      %v385 = vpop.xlane.xlu0 %384
      %v386 = vsel %vm302, %v338, -inf
      %387 = vmax.xlane.f32.xlu0 %v386
      %v388 = vpop.xlane.xlu0 %387
      %v389 = vsel %vm302, %v357, -inf
      %390 = vmax.xlane.f32.xlu0 %v389
      %v391 = vpop.xlane.xlu0 %390
      %v392 = vsel %vm302, %v376, -inf
      %393 = vmax.xlane.f32.xlu0 %v392
      %v394 = vpop.xlane.xlu0 %393
      %v395 = vmax.f32 %v379, %v385
      %v396 = vmax.f32 %v380, %v388
      %v397 = vmax.f32 %v381, %v391
      %v398 = vmax.f32 %v382, %v394
      %v399 = vsub.f32 %v379, %v395
      %v400 = vsub.f32 %v380, %v396
      %v401 = vsub.f32 %v381, %v397
      %v402 = vsub.f32 %v382, %v398
      %v403 = vmul.f32 %v399, 1.442695
      %v404 = vpow.pop %v403
      %v405 = vmul.f32 %v400, 1.442695
      %v406 = vpow.pop %v405
      %v407 = vmul.f32 %v401, 1.442695
      %v408 = vpow.pop %v407
      %v409 = vmul.f32 %v402, 1.442695
      %v410 = vpow.pop %v409
      %412 = vset.pattern.permute.xlu0 0
      %413 = vperm.xlu0 %412, %v395
      %v414 = vpop.permute.xlu0 %413
      %417 = vset.pattern.permute.xlu0 0
      %418 = vperm.xlu0 %417, %v396
      %v419 = vpop.permute.xlu0 %418
      %422 = vset.pattern.permute.xlu0 0
      %423 = vperm.xlu0 %422, %v397
      %v424 = vpop.permute.xlu0 %423
      %427 = vset.pattern.permute.xlu0 0
      %428 = vperm.xlu0 %427, %v398
      %v429 = vpop.permute.xlu0 %428
      %v431 = vsub.f32 %v319, %v414
      %v432 = vsub.f32 %v338, %v419
      %v433 = vsub.f32 %v357, %v424
      %v434 = vsub.f32 %v376, %v429
      %v435 = vmul.f32 %v431, 1.442695
      %v436 = vpow.pop %v435
      %v437 = vmul.f32 %v432, 1.442695
      %v438 = vpow.pop %v437
      %v439 = vmul.f32 %v433, 1.442695
      %v440 = vpow.pop %v439
      %v441 = vmul.f32 %v434, 1.442695
      %v442 = vpow.pop %v441
      %v443 = vld [vmem:[#allocation3] sm:$0xff]
      %v444 = vld [vmem:[#allocation3 + $0x8] sm:$0xff]
      %v445 = vld [vmem:[#allocation3 + $0x10] sm:$0xff]
      %v446 = vld [vmem:[#allocation3 + $0x18] sm:$0xff]
      %v447 = vmul.f32 %v404, %v443
      %v448 = vmul.f32 %v406, %v444
      %v449 = vmul.f32 %v408, %v445
      %v450 = vmul.f32 %v410, %v446
      %v451 = vsel %vm302, %v436, 0.0
      %452 = vadd.xlane.f32.xlu0 %v451
      %v453 = vpop.xlane.xlu0 %452
      %v454 = vsel %vm302, %v438, 0.0
      %455 = vadd.xlane.f32.xlu0 %v454
      %v456 = vpop.xlane.xlu0 %455
      %v457 = vsel %vm302, %v440, 0.0
      %458 = vadd.xlane.f32.xlu0 %v457
      %v459 = vpop.xlane.xlu0 %458
      %v460 = vsel %vm302, %v442, 0.0
      %461 = vadd.xlane.f32.xlu0 %v460
      %v462 = vpop.xlane.xlu0 %461
      %v463 = vadd.f32 %v447, %v453
      %v464 = vadd.f32 %v448, %v456
      %v465 = vadd.f32 %v449, %v459
      %v466 = vadd.f32 %v450, %v462
      %vm467 = vcmask 7168
      %468 = vst.msk [vmem:[#allocation3] sm:$0xff] %vm467, %v463
      %469 = vst.msk [vmem:[#allocation3 + $0x8] sm:$0xff] %vm467, %v464
      %470 = vst.msk [vmem:[#allocation3 + $0x10] sm:$0xff] %vm467, %v465
      %471 = vst.msk [vmem:[#allocation3 + $0x18] sm:$0xff] %vm467, %v466
      %v472 = vld [vmem:[#allocation4] sm:$0xff]
      %v473 = vld [vmem:[#allocation4 + $0x8] sm:$0xff]
      %v474 = vld [vmem:[#allocation4 + $0x10] sm:$0xff]
      %v475 = vld [vmem:[#allocation4 + $0x18] sm:$0xff]
      %477 = vset.pattern.permute.xlu0 0
      %478 = vperm.xlu0 %477, %v404
      %v479 = vpop.permute.xlu0 %478
      %482 = vset.pattern.permute.xlu0 0
      %483 = vperm.xlu0 %482, %v406
      %v484 = vpop.permute.xlu0 %483
      %487 = vset.pattern.permute.xlu0 0
      %488 = vperm.xlu0 %487, %v408
      %v489 = vpop.permute.xlu0 %488
      %492 = vset.pattern.permute.xlu0 0
      %493 = vperm.xlu0 %492, %v410
      %v494 = vpop.permute.xlu0 %493
      %v496 = vmul.f32 %v479, %v472
      %v497 = vmul.f32 %v484, %v473
      %v498 = vmul.f32 %v489, %v474
      %v499 = vmul.f32 %v494, %v475
      %v500 = vpack.c.bf16 %v436, %v436
      %v501 = vpack.c.bf16 %v438, %v438
      %v502 = vpack.c.bf16 %v440, %v440
      %v503 = vpack.c.bf16 %v442, %v442
      %v505 = vsel %vm302, %v500, 0
      %vm507 = vcmask 1043456
      %v509 = vsel %vm507, %v298, 0
      %511 = vmatpush.bf16.msra.mxu0 0
      %512 = vmatpush.bf16.msra.mxu0 0
      %513 = vmatpush.bf16.msra.mxu0 0
      %514 = vmatpush.bf16.msra.mxu0 0
      %515 = vmatpush.bf16.msra.mxu0 0
      %516 = vmatpush.bf16.msra.mxu0 0
      %517 = vmatpush.bf16.msra.mxu0 0
      %518 = vmatpush.bf16.msra.mxu0 %v509
      %519 = vmatmul.bf16.gmra.mxu0 %v505
      %v520 = vpop.f32.mrf.mxu0
      %v521 = vadd.f32 0.0, %v520
      %v522 = vpop.f32.mrf.mxu0
      %523 = vdwg.mxu0
      %v525 = vsel %vm302, %v501, 0
      %v528 = vsel %vm507, %v299, 0
      %530 = vmatpush.bf16.msra.mxu0 0
      %531 = vmatpush.bf16.msra.mxu0 0
      %532 = vmatpush.bf16.msra.mxu0 0
      %533 = vmatpush.bf16.msra.mxu0 0
      %534 = vmatpush.bf16.msra.mxu0 0
      %535 = vmatpush.bf16.msra.mxu0 0
      %536 = vmatpush.bf16.msra.mxu0 0
      %537 = vmatpush.bf16.msra.mxu0 %v528
      %538 = vmatmul.bf16.gmra.mxu0 %v525
      %v539 = vpop.f32.mrf.mxu0
      %v540 = vadd.f32 0.0, %v539
      %v541 = vpop.f32.mrf.mxu0
      %542 = vdwg.mxu0
      %v544 = vsel %vm302, %v502, 0
      %v547 = vsel %vm507, %v300, 0
      %549 = vmatpush.bf16.msra.mxu0 0
      %550 = vmatpush.bf16.msra.mxu0 0
      %551 = vmatpush.bf16.msra.mxu0 0
      %552 = vmatpush.bf16.msra.mxu0 0
      %553 = vmatpush.bf16.msra.mxu0 0
      %554 = vmatpush.bf16.msra.mxu0 0
      %555 = vmatpush.bf16.msra.mxu0 0
      %556 = vmatpush.bf16.msra.mxu0 %v547
      %557 = vmatmul.bf16.gmra.mxu0 %v544
      %v558 = vpop.f32.mrf.mxu0
      %v559 = vadd.f32 0.0, %v558
      %v560 = vpop.f32.mrf.mxu0
      %561 = vdwg.mxu0
      %v563 = vsel %vm302, %v503, 0
      %v566 = vsel %vm507, %v301, 0
      %568 = vmatpush.bf16.msra.mxu0 0
      %569 = vmatpush.bf16.msra.mxu0 0
      %570 = vmatpush.bf16.msra.mxu0 0
      %571 = vmatpush.bf16.msra.mxu0 0
      %572 = vmatpush.bf16.msra.mxu0 0
      %573 = vmatpush.bf16.msra.mxu0 0
      %574 = vmatpush.bf16.msra.mxu0 0
      %575 = vmatpush.bf16.msra.mxu0 %v566
      %576 = vmatmul.bf16.gmra.mxu0 %v563
      %v577 = vpop.f32.mrf.mxu0
      %v578 = vadd.f32 0.0, %v577
      %v579 = vpop.f32.mrf.mxu0
      %580 = vdwg.mxu0
      %v581 = vadd.f32 %v496, %v521
      %v582 = vadd.f32 %v497, %v540
      %v583 = vadd.f32 %v498, %v559
      %v584 = vadd.f32 %v499, %v578
      %585 = vst.msk [vmem:[#allocation4] sm:$0xff] %vm302, %v581
      %586 = vst.msk [vmem:[#allocation4 + $0x8] sm:$0xff] %vm302, %v582
      %587 = vst.msk [vmem:[#allocation4 + $0x10] sm:$0xff] %vm302, %v583
      %588 = vst.msk [vmem:[#allocation4 + $0x18] sm:$0xff] %vm302, %v584
      %589 = vst.msk [vmem:[#allocation2] sm:$0xff] %vm467, %v395
      %590 = vst.msk [vmem:[#allocation2 + $0x8] sm:$0xff] %vm467, %v396
      %591 = vst.msk [vmem:[#allocation2 + $0x10] sm:$0xff] %vm467, %v397
      %592 = vst.msk [vmem:[#allocation2 + $0x18] sm:$0xff] %vm467, %v398
      // Predicated region
      $region37: #{self_attention.3} parent=31 // pred_check
        %p593 = pneg %p272
      $region38: #{self_attention.3} parent=31 // pred_check_branch
        %595 = sbr.rel (%p593) target = $region40
      $region39: #{self_attention.3} parent=31 // pred_region
        %v596 = vld [vmem:[#allocation3] sm:$0xff]
        %v597 = vld [vmem:[#allocation3 + $0x8] sm:$0xff]
        %v598 = vld [vmem:[#allocation3 + $0x10] sm:$0xff]
        %v599 = vld [vmem:[#allocation3 + $0x18] sm:$0xff]
        %v600 = vrcp.pop %v596
        %v601 = vmul.f32 %v596, %v600
        %v602 = vsub.f32 1.0, %v601
        %v603 = vmul.f32 %v600, %v602
        %v604 = vadd.f32 %v600, %v603
        %vm605 = vweird.f32 %v596
        %vm606 = vweird.f32 %v600
        %vm607 = vmor %vm605, %vm606
        %v608 = vsel %vm607, %v600, %v604
        %v609 = vand.u32 2147483647, %v596
        %vm610 = vcmp.eq.f32.partialorder %v609, 8.507059e+37
        %v611 = vand.u32 %v596, 2147483648
        %v612 = vor.u32 1.1754944e-38, %v611
        %v613 = vsel %vm610, %v612, %v608
        %v614 = vrcp.pop %v597
        %v615 = vmul.f32 %v597, %v614
        %v616 = vsub.f32 1.0, %v615
        %v617 = vmul.f32 %v614, %v616
        %v618 = vadd.f32 %v614, %v617
        %vm619 = vweird.f32 %v597
        %vm620 = vweird.f32 %v614
        %vm621 = vmor %vm619, %vm620
        %v622 = vsel %vm621, %v614, %v618
        %v623 = vand.u32 2147483647, %v597
        %vm624 = vcmp.eq.f32.partialorder %v623, 8.507059e+37
        %v625 = vand.u32 %v597, 2147483648
        %v626 = vor.u32 1.1754944e-38, %v625
        %v627 = vsel %vm624, %v626, %v622
        %v628 = vrcp.pop %v598
        %v629 = vmul.f32 %v598, %v628
        %v630 = vsub.f32 1.0, %v629
        %v631 = vmul.f32 %v628, %v630
        %v632 = vadd.f32 %v628, %v631
        %vm633 = vweird.f32 %v598
        %vm634 = vweird.f32 %v628
        %vm635 = vmor %vm633, %vm634
        %v636 = vsel %vm635, %v628, %v632
        %v637 = vand.u32 2147483647, %v598
        %vm638 = vcmp.eq.f32.partialorder %v637, 8.507059e+37
        %v639 = vand.u32 %v598, 2147483648
        %v640 = vor.u32 1.1754944e-38, %v639
        %v641 = vsel %vm638, %v640, %v636
        %v642 = vrcp.pop %v599
        %v643 = vmul.f32 %v599, %v642
        %v644 = vsub.f32 1.0, %v643
        %v645 = vmul.f32 %v642, %v644
        %v646 = vadd.f32 %v642, %v645
        %vm647 = vweird.f32 %v599
        %vm648 = vweird.f32 %v642
        %vm649 = vmor %vm647, %vm648
        %v650 = vsel %vm649, %v642, %v646
        %v651 = vand.u32 2147483647, %v599
        %vm652 = vcmp.eq.f32.partialorder %v651, 8.507059e+37
        %v653 = vand.u32 %v599, 2147483648
        %v654 = vor.u32 1.1754944e-38, %v653
        %v655 = vsel %vm652, %v654, %v650
        %v656 = vld [vmem:[#allocation4] sm:$0xff]
        %v657 = vld [vmem:[#allocation4 + $0x8] sm:$0xff]
        %v658 = vld [vmem:[#allocation4 + $0x10] sm:$0xff]
        %v659 = vld [vmem:[#allocation4 + $0x18] sm:$0xff]
        %661 = vset.pattern.permute.xlu0 0
        %662 = vperm.xlu0 %661, %v613
        %v663 = vpop.permute.xlu0 %662
        %666 = vset.pattern.permute.xlu0 0
        %667 = vperm.xlu0 %666, %v627
        %v668 = vpop.permute.xlu0 %667
        %671 = vset.pattern.permute.xlu0 0
        %672 = vperm.xlu0 %671, %v641
        %v673 = vpop.permute.xlu0 %672
        %676 = vset.pattern.permute.xlu0 0
        %677 = vperm.xlu0 %676, %v655
        %v678 = vpop.permute.xlu0 %677
        %v680 = vmul.f32 %v656, %v663
        %v681 = vmul.f32 %v657, %v668
        %v682 = vmul.f32 %v658, %v673
        %v683 = vmul.f32 %v659, %v678
        %684 = vst.msk [vmem:[%s270] sm:$0xff] %vm302, %v680
        %685 = vst.msk [vmem:[%s270 + $0x8] sm:$0xff] %vm302, %v681
        %686 = vst.msk [vmem:[%s270 + $0x10] sm:$0xff] %vm302, %v682
        %687 = vst.msk [vmem:[%s270 + $0x18] sm:$0xff] %vm302, %v683
      $region40: #{self_attention.3} parent=31 // pred_fallthru
        _
      %p688 = scmp.lt.s32.totalorder %s19, 1
      %s689 = scalar_select %p688, %s19, 1
      %p690 = scmp.lt.s32.totalorder %s20, 0
      %s691 = scalar_select %p690, %s20, 0
      %s692 = smul.addr %s689, 4
      %s693 = sadd.s32 %s691, %s692
      %s694 = smul.addr %s693, 8
      %s695 = scalar_lea.vmem %s3, %s694
      // Predicated region
      $region41: #{self_attention.3} parent=31 // pred_check
        %p696 = pneg %p137
      $region42: #{self_attention.3} parent=31 // pred_check_branch
        %698 = sbr.rel (%p696) target = $region44
      $region43: #{self_attention.3} parent=31 // pred_region
        _
      $region44: #{self_attention.3} parent=31 // pred_fallthru
        _
    $region32: #{self_attention.3} parent=5 // pred_fallthru
      _
    %p699 = scmp.le.s32.totalorder 2, %s9
    // Predicated region
    $region45: #{self_attention.3} parent=5 // pred_check
      %p700 = pneg %p699
    $region46: #{self_attention.3} parent=5 // pred_check_branch
      %702 = sbr.rel (%p700) target = $region48
    $region47: #{self_attention.3} parent=5 // pred_region
      %s703 = ssub.s32 %s9, 2
      // Predicated region
      $region49: #{self_attention.3} parent=47 // pred_check
        %p704 = pneg %p143
      $region50: #{self_attention.3} parent=47 // pred_check_branch
        %706 = sbr.rel (%p704) target = $region52
      $region51: #{self_attention.3} parent=47 // pred_region
        %p707 = scmp.lt.s32.totalorder %s22, 1
        %s708 = scalar_select %p707, %s22, 1
        %p709 = scmp.lt.s32.totalorder %s23, 0
        %s710 = scalar_select %p709, %s23, 0
        %s711 = smul.addr %s708, 4
        %s712 = sadd.s32 %s710, %s711
        %s713 = smul.addr %s712, 8
        %s714 = scalar_lea.vmem %s3, %s713
      $region52: #{self_attention.3} parent=47 // pred_fallthru
        _
    $region48: #{self_attention.3} parent=5 // pred_fallthru
      _
  $region6: #{self_attention.3} parent=0 // loop_footer
    %s13 = sadd.s32 1, %s9
  $region7: #{self_attention.3} parent=0 // loop_footer_branch
    %8 = sbr.rel target = $region3
  $region8: #{self_attention.3} parent=0 // loop_exit
    _

</llo_original>
